<compile_context>
chip_gen: v7x
topology: tpu7x:2x2x1
jax: 0.10.0
libtpu: 0.0.40
codegen_flags: <defaults>
</compile_context>

<pallas_src>
import jax
import jax.numpy as jnp
from jax.experimental import pallas as pl
from jax.experimental.pallas import tpu as pltpu

NEG_SLOPE = 0.01   # nn.LeakyReLU() default
LANE = 128         # TPU lane width


def _round_up(x, m):
    return ((x + m - 1) // m) * m


def _physical_vmem_bytes():
    try:
        return int(pltpu.get_tpu_info().vmem_capacity_bytes)
    except Exception:
        return 64 * 1024 * 1024   # v7x per-core VMEM (smallest current gen)


# ----------------------------- Pallas kernel --------------------------------
def _make_down_kernel(ho_p, wo_p, c_in, k_real, k_pad, tm, n_chunks):
    """Build the conv + LeakyReLU kernel specialised to the static shapes."""
    m_b = ho_p * wo_p
    tap_w = 4 * c_in   # lane width of one polyphase tap (4 phases x C_in)

    def kernel(p_ref, w_ref, b_ref, o_ref, slab_ref):
        # p_ref   : (1, Hh, Wh, 4*C_in) polyphase-packed, padded input;
        #           p[0, i, j, (2*py+px)*C_in + c] = x_pad[n, c, 2i+py, 2j+px]
        # w_ref   : (K_pad, CO_T)        folded conv-weight tile
        # b_ref   : (1, CO_T)            bias tile
        # o_ref   : (1, Ho_p*Wo_p, CO_T) lane-dense flattened output tile
        # slab_ref: (Ho_p*Wo_p, K_pad)   per-image im2col slab (scratch)

        # Build the im2col slab once per image; reuse it for every C_out tile.
        @pl.when(pl.program_id(1) == 0)
        def _build_slab():
            for idx, (a, b) in enumerate(((0, 0), (0, 1), (1, 0), (1, 1))):
                t = p_ref[0, pl.ds(a, ho_p), pl.ds(b, wo_p), :]  # (Ho_p,Wo_p,4C)
                slab_ref[:, idx * tap_w:(idx + 1) * tap_w] = t.reshape(m_b, tap_w)
            if k_pad > k_real:
                # Zero the lane padding so the (zero) padded weight rows never
                # multiply stale VMEM (possibly NaN) garbage.
                slab_ref[:, k_real:] = jnp.zeros((m_b, k_pad - k_real),
                                                 slab_ref.dtype)

        def run_chunk(m0):
            rows = slab_ref[pl.ds(m0, tm), :]                        # (TM, K_pad)
            acc = jnp.dot(rows, w_ref[...],
                          preferred_element_type=jnp.float32)        # (TM, CO_T)
            acc = acc + b_ref[...]                                   # bias
            acc = jnp.where(acc > 0, acc, NEG_SLOPE * acc)           # LeakyReLU
            o_ref[0, pl.ds(m0, tm), :] = acc.astype(o_ref.dtype)

        if n_chunks == 1:
            run_chunk(0)
        else:
            @pl.loop(0, n_chunks)
            def _chunks(ci):
                run_chunk(pl.multiple_of(ci * tm, tm))

    return kernel


def _down_pallas(phases, w_pad, b_pad, *, n, hh, wh, c_in, ho_p, wo_p,
                 co_pad, co_t, k_real, k_pad, tm, n_chunks, vmem_limit):
    m_b = ho_p * wo_p
    n_co = co_pad // co_t
    kernel = _make_down_kernel(ho_p, wo_p, c_in, k_real, k_pad, tm, n_chunks)
    return pl.pallas_call(
        kernel,
        out_shape=jax.ShapeDtypeStruct((n, m_b, co_pad), jnp.float32),
        grid_spec=pltpu.PrefetchScalarGridSpec(
            num_scalar_prefetch=0,
            grid=(n, n_co),
            in_specs=[
                pl.BlockSpec((1, hh, wh, 4 * c_in), lambda i, j: (i, 0, 0, 0)),
                pl.BlockSpec((k_pad, co_t), lambda i, j: (0, j)),
                pl.BlockSpec((1, co_t), lambda i, j: (0, j)),
            ],
            out_specs=pl.BlockSpec((1, m_b, co_t), lambda i, j: (i, 0, j)),
            scratch_shapes=[pltpu.VMEM((m_b, k_pad), jnp.float32)],
        ),
        compiler_params=pltpu.CompilerParams(
            # Output-channel tiles (axis 1) must run in order so the im2col
            # slab built at j == 0 is valid for j > 0; images stay parallel.
            dimension_semantics=("parallel", "arbitrary"),
            vmem_limit_bytes=vmem_limit,
        ),
    )(phases, w_pad, b_pad)


# --------------------------------- wrapper -----------------------------------
@jax.jit
def down_forward(x_nchw, weight, bias):
    """Equivalent of Down.forward.

    x_nchw : (N, C_in, H, W)           float32
    weight : (C_out, C_in, 3, 3)       float32 (PyTorch OIHW layout)
    bias   : (C_out,)                  float32
    returns: (N, C_out, Ho, Wo)        float32, Ho = (H-1)//2 + 1
    """
    N, C_in, H, W = x_nchw.shape
    C_out = weight.shape[0]
    Ho = (H - 1) // 2 + 1
    Wo = (W - 1) // 2 + 1

    # ---- static tiling choices ---------------------------------------------
    co_t = 256 if C_out > 128 else 128   # 256 fills the v6e/v7x MXU; 128 otherwise
    co_pad = _round_up(C_out, co_t)
    k_real = 16 * C_in                   # 4 shifts x 4 phases x C_in
    k_pad = _round_up(k_real, LANE)

    wo_p = _round_up(Wo, 8)              # sublane-aligned (Ho,Wo)->(Ho*Wo) merge
    tm_target = max(8, (256 * 1024) // (co_t * 4))   # live dot result <= ~256 KiB
    th = max(1, min(Ho, tm_target // wo_p))
    ho_p = _round_up(Ho, th)
    tm = th * wo_p
    n_chunks = ho_p // th
    m_b = ho_p * wo_p

    Hh, Wh = ho_p + 1, wo_p + 1          # polyphase grid incl. 1-sample halo

    # ---- VMEM budget (double buffers + scratch) drives limit + assert -------
    in_blk = Hh * Wh * 4 * C_in * 4
    w_blk = k_pad * co_t * 4
    b_blk = co_t * 4
    out_blk = m_b * co_t * 4
    slab_bytes = m_b * k_pad * 4
    need = 2 * (in_blk + w_blk + b_blk + out_blk) + slab_bytes
    vmem_cap = _physical_vmem_bytes()
    # TODO(synk): tile Ho with a 1-row halo (third grid axis) instead of one
    # padded image per grid step so very large images fit v7x's 64 MiB VMEM.
    assert need + (8 << 20) <= vmem_cap, (
        f"per-image blocks need {need} B of VMEM; add Ho-row tiling with halo")
    vmem_limit = int(min(vmem_cap, max(need + (8 << 20), 16 << 20)))

    # ---- pad + polyphase pack (pure data movement, ~1x input traffic) -------
    # P[n, i, j, (2*py+px)*C_in + c] = x_pad[n, c, 2i+py, 2j+px]
    x_pad = jnp.pad(x_nchw, ((0, 0), (0, 0),
                             (1, 2 * Hh - H - 1), (1, 2 * Wh - W - 1)))
    ph = x_pad.reshape(N, C_in, Hh, 2, Wh, 2)
    ph = jnp.transpose(ph, (0, 2, 4, 3, 5, 1))     # (N, Hh, Wh, 2, 2, C_in)
    phases = ph.reshape(N, Hh, Wh, 4 * C_in)

    # ---- fold 3x3 weights into a (K, C_out) matrix matching the slab --------
    # K index = (2a+b)*4*C_in + (2py+px)*C_in + c, tap (ky,kx) = (2a+py, 2b+px);
    # ky==3 / kx==3 rows (and the lane padding rows) are zero.
    w_t = jnp.transpose(weight, (2, 3, 1, 0))              # (3,3,C_in,C_out)
    w4 = jnp.pad(w_t, ((0, 1), (0, 1), (0, 0), (0, 0)))    # (4,4,C_in,C_out)
    w4 = w4.reshape(2, 2, 2, 2, C_in, C_out)               # [a,py,b,px,c,co]
    w4 = jnp.transpose(w4, (0, 2, 1, 3, 4, 5))             # [a,b,py,px,c,co]
    w_mat = w4.reshape(k_real, C_out)
    w_pad = jnp.pad(w_mat, ((0, k_pad - k_real), (0, co_pad - C_out)))
    b_pad = jnp.pad(bias, (0, co_pad - C_out)).reshape(1, co_pad)

    out_flat = _down_pallas(phases, w_pad, b_pad, n=N, hh=Hh, wh=Wh, c_in=C_in,
                            ho_p=ho_p, wo_p=wo_p, co_pad=co_pad, co_t=co_t,
                            k_real=k_real, k_pad=k_pad, tm=tm,
                            n_chunks=n_chunks, vmem_limit=vmem_limit)

    out = out_flat.reshape(N, ho_p, wo_p, co_pad)[:, :Ho, :Wo, :C_out]
    return jnp.transpose(out, (0, 3, 1, 2))


# -------------------------------- reference ----------------------------------
def _reference(x_nchw, weight, bias):
    y = jax.lax.conv_general_dilated(
        x_nchw, weight,
        window_strides=(2, 2),
        padding=((1, 1), (1, 1)),
        dimension_numbers=("NCHW", "OIHW", "NCHW"),
    ) + bias.reshape(1, -1, 1, 1)
    return jnp.where(y > 0, y, NEG_SLOPE * y)


if __name__ == "__main__":
    key = jax.random.PRNGKey(0)
    k_x, k_w, k_b = jax.random.split(key, 3)

    N, C_in, H, W = 2, 4, 16, 16
    C_out = 8

    x = jax.random.normal(k_x, (N, C_in, H, W), dtype=jnp.float32)
    # deterministic PyTorch-like init: U(-bound, bound), bound = 1/sqrt(fan_in)
    fan_in = C_in * 3 * 3
    bound = 1.0 / (fan_in ** 0.5)
    weight = jax.random.uniform(k_w, (C_out, C_in, 3, 3), jnp.float32,
                                minval=-bound, maxval=bound)
    bias = jax.random.uniform(k_b, (C_out,), jnp.float32,
                              minval=-bound, maxval=bound)

    out = down_forward(x, weight, bias)
    out = jax.block_until_ready(out)

    ref = _reference(x, weight, bias)
    assert out.shape == (N, C_out, 8, 8), out.shape
    err = float(jnp.max(jnp.abs(out - ref)))
    assert jnp.allclose(out, ref, atol=1e-5, rtol=1e-5), err

    print("KERNEL_OK")
</pallas_src>

<mosaic_0001>
module attributes {stable_mosaic.version = 11 : i64} {
  func.func @kernel(%arg0: i32, %arg1: i32, %arg2: memref<1x9x9x16xf32, #tpu.memory_space<vmem>>, %arg3: memref<128x128xf32, #tpu.memory_space<vmem>>, %arg4: memref<1x128xf32, #tpu.memory_space<vmem>>, %arg5: memref<1x64x128xf32, #tpu.memory_space<vmem>>, %arg6: memref<64x128xf32, #tpu.memory_space<vmem>>) attributes {dimension_semantics = [#tpu.dimension_semantics<parallel>, #tpu.dimension_semantics<arbitrary>], iteration_bounds = array<i64: 2, 1>, scalar_prefetch = 0 : i64, scratch_operands = 1 : i64, tpu.core_type = #tpu.core_type<tc>, window_params = [{transform_indices = @transform_0, window_bounds = array<i64: 1, 9, 9, 16>}, {transform_indices = @transform_1, window_bounds = array<i64: 128, 128>}, {transform_indices = @transform_2, window_bounds = array<i64: 1, 128>}, {transform_indices = @transform_3, window_bounds = array<i64: 1, 64, 128>}]} {
    %c0_i32 = arith.constant 0 : i32
    %0 = arith.cmpi eq, %arg1, %c0_i32 : i32
    %1 = arith.extui %0 : i1 to i32
    %c0_i32_0 = arith.constant 0 : i32
    %2 = arith.cmpi ne, %1, %c0_i32_0 : i32
    scf.if %2 {
      %c0_11 = arith.constant 0 : index
      %c0_12 = arith.constant 0 : index
      %c0_13 = arith.constant 0 : index
      %c0_14 = arith.constant 0 : index
      %17 = vector.load %arg2[%c0_11, %c0_12, %c0_13, %c0_14] : memref<1x9x9x16xf32, #tpu.memory_space<vmem>>, vector<1x8x8x16xf32>
      %18 = vector.shape_cast %17 : vector<1x8x8x16xf32> to vector<8x8x16xf32>
      %19 = vector.shape_cast %18 : vector<8x8x16xf32> to vector<64x16xf32>
      %c0_15 = arith.constant 0 : index
      %c0_16 = arith.constant 0 : index
      %20 = vector.load %arg6[%c0_15, %c0_16] : memref<64x128xf32, #tpu.memory_space<vmem>>, vector<64x16xf32>
      tpu.vector_store %arg6[%c0_15, %c0_16], %19 {strides = array<i32>} : memref<64x128xf32, #tpu.memory_space<vmem>>, vector<64x16xf32>,
      %c0_17 = arith.constant 0 : index
      %c0_18 = arith.constant 0 : index
      %c1 = arith.constant 1 : index
      %c0_19 = arith.constant 0 : index
      %21 = vector.load %arg2[%c0_17, %c0_18, %c1, %c0_19] : memref<1x9x9x16xf32, #tpu.memory_space<vmem>>, vector<1x8x8x16xf32>
      %22 = vector.shape_cast %21 : vector<1x8x8x16xf32> to vector<8x8x16xf32>
      %23 = vector.shape_cast %22 : vector<8x8x16xf32> to vector<64x16xf32>
      %c0_20 = arith.constant 0 : index
      %c16 = arith.constant 16 : index
      %24 = vector.load %arg6[%c0_20, %c16] : memref<64x128xf32, #tpu.memory_space<vmem>>, vector<64x16xf32>
      tpu.vector_store %arg6[%c0_20, %c16], %23 {strides = array<i32>} : memref<64x128xf32, #tpu.memory_space<vmem>>, vector<64x16xf32>,
      %c0_21 = arith.constant 0 : index
      %c1_22 = arith.constant 1 : index
      %c0_23 = arith.constant 0 : index
      %c0_24 = arith.constant 0 : index
      %25 = vector.load %arg2[%c0_21, %c1_22, %c0_23, %c0_24] : memref<1x9x9x16xf32, #tpu.memory_space<vmem>>, vector<1x8x8x16xf32>
      %26 = vector.shape_cast %25 : vector<1x8x8x16xf32> to vector<8x8x16xf32>
      %27 = vector.shape_cast %26 : vector<8x8x16xf32> to vector<64x16xf32>
      %c0_25 = arith.constant 0 : index
      %c32 = arith.constant 32 : index
      %28 = vector.load %arg6[%c0_25, %c32] : memref<64x128xf32, #tpu.memory_space<vmem>>, vector<64x16xf32>
      tpu.vector_store %arg6[%c0_25, %c32], %27 {strides = array<i32>} : memref<64x128xf32, #tpu.memory_space<vmem>>, vector<64x16xf32>,
      %c0_26 = arith.constant 0 : index
      %c1_27 = arith.constant 1 : index
      %c1_28 = arith.constant 1 : index
      %c0_29 = arith.constant 0 : index
      %29 = vector.load %arg2[%c0_26, %c1_27, %c1_28, %c0_29] : memref<1x9x9x16xf32, #tpu.memory_space<vmem>>, vector<1x8x8x16xf32>
      %30 = vector.shape_cast %29 : vector<1x8x8x16xf32> to vector<8x8x16xf32>
      %31 = vector.shape_cast %30 : vector<8x8x16xf32> to vector<64x16xf32>
      %c0_30 = arith.constant 0 : index
      %c48 = arith.constant 48 : index
      %32 = vector.load %arg6[%c0_30, %c48] : memref<64x128xf32, #tpu.memory_space<vmem>>, vector<64x16xf32>
      tpu.vector_store %arg6[%c0_30, %c48], %31 {strides = array<i32>} : memref<64x128xf32, #tpu.memory_space<vmem>>, vector<64x16xf32>,
      %cst_31 = arith.constant 0.000000e+00 : f32
      %33 = vector.broadcast %cst_31 : f32 to vector<64x64xf32>
      %c0_32 = arith.constant 0 : index
      %c64 = arith.constant 64 : index
      %34 = vector.load %arg6[%c0_32, %c64] : memref<64x128xf32, #tpu.memory_space<vmem>>, vector<64x64xf32>
      tpu.vector_store %arg6[%c0_32, %c64], %33 {strides = array<i32>} : memref<64x128xf32, #tpu.memory_space<vmem>>, vector<64x64xf32>,
    } else {
    }
    %c0 = arith.constant 0 : index
    %c0_1 = arith.constant 0 : index
    %3 = vector.load %arg6[%c0, %c0_1] : memref<64x128xf32, #tpu.memory_space<vmem>>, vector<64x128xf32>
    %c0_2 = arith.constant 0 : index
    %c0_3 = arith.constant 0 : index
    %4 = vector.load %arg3[%c0_2, %c0_3] : memref<128x128xf32, #tpu.memory_space<vmem>>, vector<128x128xf32>
    %cst = arith.constant dense<0.000000e+00> : vector<64x128xf32>
    %5 = tpu.matmul %3, %4, %cst {dimension_numbers = #tpu.dot_dimension_numbers<[1], [0], [0], [1], [0, 0, 1, 1], [], []>} : vector<64x128xf32>, vector<128x128xf32>, vector<64x128xf32> -> vector<64x128xf32>
    %c0_4 = arith.constant 0 : index
    %c0_5 = arith.constant 0 : index
    %6 = vector.load %arg4[%c0_4, %c0_5] : memref<1x128xf32, #tpu.memory_space<vmem>>, vector<1x128xf32>
    %7 = vector.broadcast %6 : vector<1x128xf32> to vector<64x128xf32>
    %8 = arith.addf %5, %7 : vector<64x128xf32>
    %cst_6 = arith.constant 0.000000e+00 : f32
    %9 = vector.broadcast %cst_6 : f32 to vector<64x128xf32>
    %10 = arith.cmpf ogt, %8, %9 : vector<64x128xf32>
    %cst_7 = arith.constant 0.00999999977 : f32
    %11 = vector.broadcast %cst_7 : f32 to vector<64x128xf32>
    %12 = arith.mulf %11, %8 : vector<64x128xf32>
    %13 = arith.select %10, %8, %12 : vector<64x128xi1>, vector<64x128xf32>
    %c0_8 = arith.constant 0 : index
    %c0_9 = arith.constant 0 : index
    %c0_10 = arith.constant 0 : index
    %14 = vector.load %arg5[%c0_8, %c0_9, %c0_10] : memref<1x64x128xf32, #tpu.memory_space<vmem>>, vector<1x64x128xf32>
    %15 = vector.shape_cast %14 : vector<1x64x128xf32> to vector<64x128xf32>
    %16 = vector.shape_cast %13 : vector<64x128xf32> to vector<1x64x128xf32>
    tpu.vector_store %arg5[%c0_8, %c0_9, %c0_10], %16 {strides = array<i32>} : memref<1x64x128xf32, #tpu.memory_space<vmem>>, vector<1x64x128xf32>,
    return
  }
  func.func @transform_0(%arg0: i32, %arg1: i32) -> (i32, i32, i32, i32) {
    %c0_i32 = arith.constant 0 : i32
    %c0_i32_0 = arith.constant 0 : i32
    %c0_i32_1 = arith.constant 0 : i32
    %c0_i32_2 = arith.constant 0 : i32
    return %arg0, %c0_i32, %c0_i32_0, %c0_i32_1 : i32, i32, i32, i32
  }
  func.func @transform_1(%arg0: i32, %arg1: i32) -> (i32, i32) {
    %c0_i32 = arith.constant 0 : i32
    %c0_i32_0 = arith.constant 0 : i32
    return %c0_i32, %arg1 : i32, i32
  }
  func.func @transform_2(%arg0: i32, %arg1: i32) -> (i32, i32) {
    %c0_i32 = arith.constant 0 : i32
    %c0_i32_0 = arith.constant 0 : i32
    return %c0_i32, %arg1 : i32, i32
  }
  func.func @transform_3(%arg0: i32, %arg1: i32) -> (i32, i32, i32) {
    %c0_i32 = arith.constant 0 : i32
    %c0_i32_0 = arith.constant 0 : i32
    return %arg0, %c0_i32, %arg1 : i32, i32, i32
  }
}

</mosaic_0001>

<llo_original>
// kernel: down_forward.1
$region0: #{down_forward.1}
  #allocation0 [shape = 'u32[]', space=smem, size = 0x4, offset = 0x4, fixed_abs, tag = 'smem constant byte address 0x4 - core index']
  #allocation1 [shape = 'u32[144,128]{1,0:T(1,128)}', space=vmem, size = 0x12000, scoped, tag = 'internal scratch']
  #allocation2 [shape = 'f32[64,128]{1,0:T(8,128)}', space=vmem, size = 0x8000, scoped, tag = 'scratch operand']
  %s0 = inlined_call_operand.vmem [shape: f32[2,9,9,16], index: 0, kind: input, shape index: {}]
  %s1 = inlined_call_operand.vmem [shape: f32[128,128], index: 1, kind: input, shape index: {}]
  %s2 = inlined_call_operand.vmem [shape: f32[1,128], index: 2, kind: input, shape index: {}]
  %s3 = inlined_call_operand.vmem [shape: f32[2,64,128], index: 3, kind: output, shape index: {}]
  %s4 = sld [smem:[#allocation0]]
  $region49: #{down_forward.1} parent=0
    _
  %s6 = ssub.s32 1, %s4
  %s7 = scalar_select 0, %s6, %s4
  loop: start=0, step=1, limit=4
  $region2: #{down_forward.1} parent=0 // loop_pre_header
    _
  $region3: #{down_forward.1} parent=0 // loop_header
    %s9 = sphi 0, %s13
    %p10 = scmp.ge.s32.totalorder %s9, 4
    %s16 = sphi 0, %s28
    %s17 = sphi 0, %s24
    %s18 = sphi 0, %s16
    %s19 = sphi 0, %s17
    %s20 = sphi 0, %s18
    %s21 = sphi 0, %s19
    %s31 = sphi 0, %s33
    %s34 = sphi 0, %s31
    %s35 = sphi 0, %s34
    %s51 = sphi 0, %s35
    %s57 = sphi 0, %s59
    %s60 = sphi 0, %s57
    %s61 = sphi 0, %s60
    %s77 = sphi 0, %s61
    %s83 = sphi 0, %s85
    %s86 = sphi 0, %s83
    %s87 = sphi 0, %s86
    %s103 = sphi 0, %s87
    %s111 = sphi 0, %s113
    %s114 = sphi 0, %s111
    %s115 = sphi 0, %s114
    %s131 = sphi 0, %s115
  $region4: #{down_forward.1} parent=0 // loop_header_branch
    %12 = sbr.rel (%p10) target = $region8
  $region5: #{down_forward.1} parent=0 // loop_body
    %s14 = ssub.s32 %s9, 1
    %s15 = ssub.s32 %s9, 2
    %s22 = sadd.s32 1, %s17
    %p23 = scmp.ge.s32.totalorder %s22, 1
    %s24 = scalar_select %p23, 0, %s22
    %s25 = sadd.s32 1, %s16
    %s26 = scalar_select %p23, %s25, %s16
    %p27 = scmp.ge.s32.totalorder %s26, 2
    %s28 = scalar_select %p27, 0, %s26
    %s29 = ssub.s32 %s16, %s28
    %p30 = scmp.eq.s32.totalorder %s29, 0
    %s32 = sadd.s32 %s31, 1
    %s33 = scalar_select %p30, %s31, %s32
    %p36 = pneg %p30
    %p37 = scmp.eq.s32.totalorder %s9, 1
    %p38 = por %p36, %p37
    %p39 = scmp.ne.s32.totalorder %s31, %s34
    %p40 = scmp.eq.s32.totalorder %s9, 0
    %p41 = por %p39, %p40
    %p42 = scmp.ne.s32.totalorder %s31, %s34
    %p43 = scmp.eq.s32.totalorder %s14, 1
    %p44 = por %p42, %p43
    %p45 = scmp.ne.s32.totalorder %s34, %s35
    %p46 = scmp.eq.s32.totalorder %s14, 0
    %p47 = por %p45, %p46
    %p48 = scmp.ne.s32.totalorder %s34, %s35
    %p49 = scmp.eq.s32.totalorder %s15, 1
    %p50 = por %p48, %p49
    %p52 = scmp.ne.s32.totalorder %s35, %s51
    %p53 = scmp.eq.s32.totalorder %s15, 0
    %p54 = por %p52, %p53
    %s55 = ssub.s32 %s17, %s24
    %p56 = scmp.eq.s32.totalorder %s55, 0
    %s58 = sadd.s32 %s57, 1
    %s59 = scalar_select %p56, %s57, %s58
    %p62 = pneg %p56
    %p63 = scmp.eq.s32.totalorder %s9, 1
    %p64 = por %p62, %p63
    %p65 = scmp.ne.s32.totalorder %s57, %s60
    %p66 = scmp.eq.s32.totalorder %s9, 0
    %p67 = por %p65, %p66
    %p68 = scmp.ne.s32.totalorder %s57, %s60
    %p69 = scmp.eq.s32.totalorder %s14, 1
    %p70 = por %p68, %p69
    %p71 = scmp.ne.s32.totalorder %s60, %s61
    %p72 = scmp.eq.s32.totalorder %s14, 0
    %p73 = por %p71, %p72
    %p74 = scmp.ne.s32.totalorder %s60, %s61
    %p75 = scmp.eq.s32.totalorder %s15, 1
    %p76 = por %p74, %p75
    %p78 = scmp.ne.s32.totalorder %s61, %s77
    %p79 = scmp.eq.s32.totalorder %s15, 0
    %p80 = por %p78, %p79
    %s81 = ssub.s32 %s17, %s24
    %p82 = scmp.eq.s32.totalorder %s81, 0
    %s84 = sadd.s32 %s83, 1
    %s85 = scalar_select %p82, %s83, %s84
    %p88 = pneg %p82
    %p89 = scmp.eq.s32.totalorder %s9, 1
    %p90 = por %p88, %p89
    %p91 = scmp.ne.s32.totalorder %s83, %s86
    %p92 = scmp.eq.s32.totalorder %s9, 0
    %p93 = por %p91, %p92
    %p94 = scmp.ne.s32.totalorder %s83, %s86
    %p95 = scmp.eq.s32.totalorder %s14, 1
    %p96 = por %p94, %p95
    %p97 = scmp.ne.s32.totalorder %s86, %s87
    %p98 = scmp.eq.s32.totalorder %s14, 0
    %p99 = por %p97, %p98
    %p100 = scmp.ne.s32.totalorder %s86, %s87
    %p101 = scmp.eq.s32.totalorder %s15, 1
    %p102 = por %p100, %p101
    %p104 = scmp.ne.s32.totalorder %s87, %s103
    %p105 = scmp.eq.s32.totalorder %s15, 0
    %p106 = por %p104, %p105
    %s107 = ssub.s32 %s16, %s28
    %s108 = ssub.s32 %s17, %s24
    %s109 = sor.u32 %s107, %s108
    %p110 = scmp.eq.s32.totalorder %s109, 0
    %s112 = sadd.s32 %s111, 1
    %s113 = scalar_select %p110, %s111, %s112
    %p116 = pneg %p110
    %p117 = scmp.eq.s32.totalorder %s9, 1
    %p118 = por %p116, %p117
    %p119 = scmp.ne.s32.totalorder %s111, %s114
    %p120 = scmp.eq.s32.totalorder %s9, 0
    %p121 = por %p119, %p120
    %p122 = scmp.ne.s32.totalorder %s111, %s114
    %p123 = scmp.eq.s32.totalorder %s14, 1
    %p124 = por %p122, %p123
    %p125 = scmp.ne.s32.totalorder %s114, %s115
    %p126 = scmp.eq.s32.totalorder %s14, 0
    %p127 = por %p125, %p126
    %p128 = scmp.ne.s32.totalorder %s114, %s115
    %p129 = scmp.eq.s32.totalorder %s15, 1
    %p130 = por %p128, %p129
    %p132 = scmp.ne.s32.totalorder %s115, %s131
    %p133 = scmp.eq.s32.totalorder %s15, 0
    %p134 = por %p132, %p133
    %p135 = scmp.le.s32.totalorder 1, %s9
    %p136 = scmp.lt.s32.totalorder %s9, 3
    %p137 = pnand %p135, %p136
    %p138 = pneg %p137
    // Predicated region
    $region9: #{down_forward.1} parent=5 // pred_check
      _
    $region10: #{down_forward.1} parent=5 // pred_check_branch
      %140 = sbr.rel (%p137) target = $region12
    $region11: #{down_forward.1} parent=5 // pred_region
      %s141 = ssub.s32 %s9, 1
      // Predicated region
      $region13: #{down_forward.1} parent=11 // pred_check
        %p142 = pneg %p73
      $region14: #{down_forward.1} parent=11 // pred_check_branch
        %144 = sbr.rel (%p142) target = $region16
      $region15: #{down_forward.1} parent=11 // pred_region
        %p145 = scmp.lt.s32.totalorder %s19, 0
        %s146 = scalar_select %p145, %s19, 0
        %s147 = smul.addr %s146, 8
        %s148 = scalar_lea.vmem %s1, %s147
      $region16: #{down_forward.1} parent=11 // pred_fallthru
        _
      // Predicated region
      $region17: #{down_forward.1} parent=11 // pred_check
        %p149 = pneg %p99
      $region18: #{down_forward.1} parent=11 // pred_check_branch
        %151 = sbr.rel (%p149) target = $region20
      $region19: #{down_forward.1} parent=11 // pred_region
        %p152 = scmp.lt.s32.totalorder %s19, 0
        %s153 = scalar_select %p152, %s19, 0
        %s154 = scalar_lea.vmem %s2, %s153
      $region20: #{down_forward.1} parent=11 // pred_fallthru
        _
    $region12: #{down_forward.1} parent=5 // pred_fallthru
      _
    %p155 = scmp.lt.s32.totalorder %s9, 2
    // Predicated region
    $region21: #{down_forward.1} parent=5 // pred_check
      %p156 = pneg %p155
    $region22: #{down_forward.1} parent=5 // pred_check_branch
      %158 = sbr.rel (%p156) target = $region24
    $region23: #{down_forward.1} parent=5 // pred_region
      // Predicated region
      $region25: #{down_forward.1} parent=23 // pred_check
        %p159 = pneg %p41
      $region26: #{down_forward.1} parent=23 // pred_check_branch
        %161 = sbr.rel (%p159) target = $region28
      $region27: #{down_forward.1} parent=23 // pred_region
        %p162 = scmp.lt.s32.totalorder %s16, 1
        %s163 = scalar_select %p162, %s16, 1
        %s164 = smul.addr %s163, 18
        %s165 = smul.addr %s164, 8
        %s166 = scalar_lea.vmem %s0, %s165
      $region28: #{down_forward.1} parent=23 // pred_fallthru
        _
    $region24: #{down_forward.1} parent=5 // pred_fallthru
      _
    %p167 = scmp.le.s32.totalorder 1, %s9
    %p168 = scmp.lt.s32.totalorder %s9, 3
    %p169 = pnand %p167, %p168
    %p170 = pneg %p169
    // Predicated region
    $region29: #{down_forward.1} parent=5 // pred_check
      _
    $region30: #{down_forward.1} parent=5 // pred_check_branch
      %172 = sbr.rel (%p169) target = $region32
    $region31: #{down_forward.1} parent=5 // pred_region
      %s173 = ssub.s32 %s9, 1
      %p174 = scmp.lt.s32.totalorder %s18, 1
      %s175 = scalar_select %p174, %s18, 1
      %s176 = smul.addr %s175, 18
      %s177 = smul.addr %s176, 8
      %s178 = scalar_lea.vmem %s0, %s177
      %p179 = pneg %p47
      %p180 = pneg %p44
      %p181 = scmp.lt.s32.totalorder %s19, 0
      %s182 = scalar_select %p181, %s19, 0
      %s183 = smul.addr %s182, 8
      %s184 = scalar_lea.vmem %s1, %s183
      %p185 = pneg %p73
      %p186 = pneg %p70
      %p187 = scmp.lt.s32.totalorder %s19, 0
      %s188 = scalar_select %p187, %s19, 0
      %s189 = scalar_lea.vmem %s2, %s188
      %p190 = pneg %p99
      %p191 = pneg %p96
      %p192 = pneg %p127
      %p193 = pneg %p124
      %p194 = scmp.lt.s32.totalorder %s18, 1
      %s195 = scalar_select %p194, %s18, 1
      %p196 = scmp.lt.s32.totalorder %s19, 0
      %s197 = scalar_select %p196, %s19, 0
      %s198 = smul.addr %s195, 8
      %s199 = sadd.s32 %s197, %s198
      %s200 = smul.addr %s199, 8
      %s201 = scalar_lea.vmem %s3, %s200
      %p202 = scmp.lt.s32.totalorder %s18, 1
      %s203 = scalar_select %p202, %s18, 1
      %s204 = smul.addr %s203, 18
      %s205 = smul.addr %s204, 8
      %s206 = scalar_lea.vmem %s0, %s205
      %p207 = scmp.lt.s32.totalorder %s19, 0
      %s208 = scalar_select %p207, %s19, 0
      %s209 = smul.addr %s208, 8
      %s210 = scalar_lea.vmem %s1, %s209
      %p211 = scmp.lt.s32.totalorder %s19, 0
      %s212 = scalar_select %p211, %s19, 0
      %s213 = scalar_lea.vmem %s2, %s212
      %p214 = scmp.lt.s32.totalorder %s18, 1
      %s215 = scalar_select %p214, %s18, 1
      %p216 = scmp.lt.s32.totalorder %s19, 0
      %s217 = scalar_select %p216, %s19, 0
      %s218 = smul.addr %s215, 8
      %s219 = sadd.s32 %s217, %s218
      %s220 = smul.addr %s219, 8
      %s221 = scalar_lea.vmem %s3, %s220
      %p222 = scmp.eq.s32.totalorder %s19, 0
      // Predicated region
      $region33: #{down_forward.1} parent=31 // pred_check
        %p223 = pneg %p222
      $region34: #{down_forward.1} parent=31 // pred_check_branch
        %225 = sbr.rel (%p223) target = $region36
      $region35: #{down_forward.1} parent=31 // pred_region
        %v226 = vld [vmem:[%s206] sm:$0xff]
        %v227 = vld [vmem:[%s206 + $0x10] sm:$0xff]
        %v228 = vld [vmem:[%s206 + $0x20] sm:$0xff]
        %v229 = vld [vmem:[%s206 + $0x30] sm:$0xff]
        %v230 = vld [vmem:[%s206 + $0x40] sm:$0xff]
        %v231 = vld [vmem:[%s206 + $0x50] sm:$0xff]
        %v232 = vld [vmem:[%s206 + $0x60] sm:$0xff]
        %v233 = vld [vmem:[%s206 + $0x70] sm:$0xff]
        %vm234 = vcmask 130048
        %235 = vst.msk [vmem:[#allocation2] sm:$0xff] %vm234, %v226
        %236 = vst.msk [vmem:[#allocation2 + $0x8] sm:$0xff] %vm234, %v227
        %237 = vst.msk [vmem:[#allocation2 + $0x10] sm:$0xff] %vm234, %v228
        %238 = vst.msk [vmem:[#allocation2 + $0x18] sm:$0xff] %vm234, %v229
        %239 = vst.msk [vmem:[#allocation2 + $0x20] sm:$0xff] %vm234, %v230
        %240 = vst.msk [vmem:[#allocation2 + $0x28] sm:$0xff] %vm234, %v231
        %241 = vst.msk [vmem:[#allocation2 + $0x30] sm:$0xff] %vm234, %v232
        %242 = vst.msk [vmem:[#allocation2 + $0x38] sm:$0xff] %vm234, %v233
        %v243 = vld [vmem:[%s206 + $0x1] sm:$0xff]
        %v244 = vld [vmem:[%s206 + $0x11] sm:$0xff]
        %v245 = vld [vmem:[%s206 + $0x21] sm:$0xff]
        %v246 = vld [vmem:[%s206 + $0x31] sm:$0xff]
        %v247 = vld [vmem:[%s206 + $0x41] sm:$0xff]
        %v248 = vld [vmem:[%s206 + $0x51] sm:$0xff]
        %v249 = vld [vmem:[%s206 + $0x61] sm:$0xff]
        %v250 = vld [vmem:[%s206 + $0x71] sm:$0xff]
        %259 = vrot.lane.b32.xlu0 %v243, 16
        %v260 = vpop.permute.xlu0 %259
        %261 = vrot.lane.b32.xlu0 %v244, 16
        %v262 = vpop.permute.xlu0 %261
        %263 = vrot.lane.b32.xlu0 %v245, 16
        %v264 = vpop.permute.xlu0 %263
        %265 = vrot.lane.b32.xlu0 %v246, 16
        %v266 = vpop.permute.xlu0 %265
        %267 = vrot.lane.b32.xlu0 %v247, 16
        %v268 = vpop.permute.xlu0 %267
        %269 = vrot.lane.b32.xlu0 %v248, 16
        %v270 = vpop.permute.xlu0 %269
        %271 = vrot.lane.b32.xlu0 %v249, 16
        %v272 = vpop.permute.xlu0 %271
        %273 = vrot.lane.b32.xlu0 %v250, 16
        %v274 = vpop.permute.xlu0 %273
        %vm283 = vcmask 261248
        %284 = vst.msk [vmem:[#allocation2] sm:$0xff] %vm283, %v260
        %285 = vst.msk [vmem:[#allocation2 + $0x8] sm:$0xff] %vm283, %v262
        %286 = vst.msk [vmem:[#allocation2 + $0x10] sm:$0xff] %vm283, %v264
        %287 = vst.msk [vmem:[#allocation2 + $0x18] sm:$0xff] %vm283, %v266
        %288 = vst.msk [vmem:[#allocation2 + $0x20] sm:$0xff] %vm283, %v268
        %289 = vst.msk [vmem:[#allocation2 + $0x28] sm:$0xff] %vm283, %v270
        %290 = vst.msk [vmem:[#allocation2 + $0x30] sm:$0xff] %vm283, %v272
        %291 = vst.msk [vmem:[#allocation2 + $0x38] sm:$0xff] %vm283, %v274
        %s292 = scalar_lea.vmem %s206, 16
        %v293 = vld [vmem:[%s292] sm:$0xff]
        %v294 = vld [vmem:[%s292 + $0x10] sm:$0xff]
        %v295 = vld [vmem:[%s292 + $0x20] sm:$0xff]
        %v296 = vld [vmem:[%s292 + $0x30] sm:$0xff]
        %v297 = vld [vmem:[%s292 + $0x40] sm:$0xff]
        %v298 = vld [vmem:[%s292 + $0x50] sm:$0xff]
        %v299 = vld [vmem:[%s292 + $0x60] sm:$0xff]
        %v300 = vld [vmem:[%s292 + $0x70] sm:$0xff]
        %309 = vrot.lane.b32.xlu0 %v293, 32
        %v310 = vpop.permute.xlu0 %309
        %311 = vrot.lane.b32.xlu0 %v294, 32
        %v312 = vpop.permute.xlu0 %311
        %313 = vrot.lane.b32.xlu0 %v295, 32
        %v314 = vpop.permute.xlu0 %313
        %315 = vrot.lane.b32.xlu0 %v296, 32
        %v316 = vpop.permute.xlu0 %315
        %317 = vrot.lane.b32.xlu0 %v297, 32
        %v318 = vpop.permute.xlu0 %317
        %319 = vrot.lane.b32.xlu0 %v298, 32
        %v320 = vpop.permute.xlu0 %319
        %321 = vrot.lane.b32.xlu0 %v299, 32
        %v322 = vpop.permute.xlu0 %321
        %323 = vrot.lane.b32.xlu0 %v300, 32
        %v324 = vpop.permute.xlu0 %323
        %vm333 = vcmask 392448
        %334 = vst.msk [vmem:[#allocation2] sm:$0xff] %vm333, %v310
        %335 = vst.msk [vmem:[#allocation2 + $0x8] sm:$0xff] %vm333, %v312
        %336 = vst.msk [vmem:[#allocation2 + $0x10] sm:$0xff] %vm333, %v314
        %337 = vst.msk [vmem:[#allocation2 + $0x18] sm:$0xff] %vm333, %v316
        %338 = vst.msk [vmem:[#allocation2 + $0x20] sm:$0xff] %vm333, %v318
        %339 = vst.msk [vmem:[#allocation2 + $0x28] sm:$0xff] %vm333, %v320
        %340 = vst.msk [vmem:[#allocation2 + $0x30] sm:$0xff] %vm333, %v322
        %341 = vst.msk [vmem:[#allocation2 + $0x38] sm:$0xff] %vm333, %v324
        %v342 = vld [vmem:[%s292 + $0x1] sm:$0xff]
        %v343 = vld [vmem:[%s292 + $0x11] sm:$0xff]
        %v344 = vld [vmem:[%s292 + $0x21] sm:$0xff]
        %v345 = vld [vmem:[%s292 + $0x31] sm:$0xff]
        %v346 = vld [vmem:[%s292 + $0x41] sm:$0xff]
        %v347 = vld [vmem:[%s292 + $0x51] sm:$0xff]
        %v348 = vld [vmem:[%s292 + $0x61] sm:$0xff]
        %v349 = vld [vmem:[%s292 + $0x71] sm:$0xff]
        %358 = vrot.lane.b32.xlu0 %v342, 48
        %v359 = vpop.permute.xlu0 %358
        %360 = vrot.lane.b32.xlu0 %v343, 48
        %v361 = vpop.permute.xlu0 %360
        %362 = vrot.lane.b32.xlu0 %v344, 48
        %v363 = vpop.permute.xlu0 %362
        %364 = vrot.lane.b32.xlu0 %v345, 48
        %v365 = vpop.permute.xlu0 %364
        %366 = vrot.lane.b32.xlu0 %v346, 48
        %v367 = vpop.permute.xlu0 %366
        %368 = vrot.lane.b32.xlu0 %v347, 48
        %v369 = vpop.permute.xlu0 %368
        %370 = vrot.lane.b32.xlu0 %v348, 48
        %v371 = vpop.permute.xlu0 %370
        %372 = vrot.lane.b32.xlu0 %v349, 48
        %v373 = vpop.permute.xlu0 %372
        %vm382 = vcmask 523648
        %383 = vst.msk [vmem:[#allocation2] sm:$0xff] %vm382, %v359
        %384 = vst.msk [vmem:[#allocation2 + $0x8] sm:$0xff] %vm382, %v361
        %385 = vst.msk [vmem:[#allocation2 + $0x10] sm:$0xff] %vm382, %v363
        %386 = vst.msk [vmem:[#allocation2 + $0x18] sm:$0xff] %vm382, %v365
        %387 = vst.msk [vmem:[#allocation2 + $0x20] sm:$0xff] %vm382, %v367
        %388 = vst.msk [vmem:[#allocation2 + $0x28] sm:$0xff] %vm382, %v369
        %389 = vst.msk [vmem:[#allocation2 + $0x30] sm:$0xff] %vm382, %v371
        %390 = vst.msk [vmem:[#allocation2 + $0x38] sm:$0xff] %vm382, %v373
        %vm391 = vcmask 1048064
        %392 = vst.msk [vmem:[#allocation2] sm:$0xff] %vm391, 0.0
        %393 = vst.msk [vmem:[#allocation2 + $0x8] sm:$0xff] %vm391, 0.0
        %394 = vst.msk [vmem:[#allocation2 + $0x10] sm:$0xff] %vm391, 0.0
        %395 = vst.msk [vmem:[#allocation2 + $0x18] sm:$0xff] %vm391, 0.0
        %396 = vst.msk [vmem:[#allocation2 + $0x20] sm:$0xff] %vm391, 0.0
        %397 = vst.msk [vmem:[#allocation2 + $0x28] sm:$0xff] %vm391, 0.0
        %398 = vst.msk [vmem:[#allocation2 + $0x30] sm:$0xff] %vm391, 0.0
        %399 = vst.msk [vmem:[#allocation2 + $0x38] sm:$0xff] %vm391, 0.0
      $region36: #{down_forward.1} parent=31 // pred_fallthru
        _
      %v400 = vld [vmem:[#allocation2] sm:$0xff]
      %v401 = vld [vmem:[#allocation2 + $0x8] sm:$0xff]
      %v402 = vld [vmem:[#allocation2 + $0x10] sm:$0xff]
      %v403 = vld [vmem:[#allocation2 + $0x18] sm:$0xff]
      %v404 = vld [vmem:[#allocation2 + $0x20] sm:$0xff]
      %v405 = vld [vmem:[#allocation2 + $0x28] sm:$0xff]
      %v406 = vld [vmem:[#allocation2 + $0x30] sm:$0xff]
      %v407 = vld [vmem:[#allocation2 + $0x38] sm:$0xff]
      %v408 = vld [vmem:[%s210] sm:$0xff]
      %v409 = vld [vmem:[%s210 + $0x8] sm:$0xff]
      %v410 = vld [vmem:[%s210 + $0x10] sm:$0xff]
      %v411 = vld [vmem:[%s210 + $0x18] sm:$0xff]
      %v412 = vld [vmem:[%s210 + $0x20] sm:$0xff]
      %v413 = vld [vmem:[%s210 + $0x28] sm:$0xff]
      %v414 = vld [vmem:[%s210 + $0x30] sm:$0xff]
      %v415 = vld [vmem:[%s210 + $0x38] sm:$0xff]
      %v416 = vld [vmem:[%s210 + $0x40] sm:$0xff]
      %v417 = vld [vmem:[%s210 + $0x48] sm:$0xff]
      %v418 = vld [vmem:[%s210 + $0x50] sm:$0xff]
      %v419 = vld [vmem:[%s210 + $0x58] sm:$0xff]
      %v420 = vld [vmem:[%s210 + $0x60] sm:$0xff]
      %v421 = vld [vmem:[%s210 + $0x68] sm:$0xff]
      %v422 = vld [vmem:[%s210 + $0x70] sm:$0xff]
      %v423 = vld [vmem:[%s210 + $0x78] sm:$0xff]
      %v424 = vld [vmem:[%s213] sm:$0x1]
      %v426 = vlaneseq
      %v427 = vshrl.u32 %v426, 7
      %v428 = vsub.s32 0, %v427
      %v429 = vrot.slane %v424, %v428
      %431 = vmatprep.subr.mxu0 0.0
      %432 = vmatpush1.msra.mxu0 %v408
      %433 = vmatprep.subr.mxu0 0.0
      %434 = vmatpush1.msra.mxu0 %v409
      %435 = vmatprep.subr.mxu0 0.0
      %436 = vmatpush1.msra.mxu0 %v410
      %437 = vmatprep.subr.mxu0 0.0
      %438 = vmatpush1.msra.mxu0 %v411
      %439 = vmatprep.subr.mxu0 0.0
      %440 = vmatpush1.msra.mxu0 %v412
      %441 = vmatprep.subr.mxu0 0.0
      %442 = vmatpush1.msra.mxu0 %v413
      %443 = vmatprep.subr.mxu0 0.0
      %444 = vmatpush1.msra.mxu0 %v414
      %445 = vmatprep.subr.mxu0 0.0
      %446 = vmatpush1.msra.mxu0 %v415
      %447 = vmatprep.subr.mxu0 0.0
      %448 = vmatpush1.msra.mxu0 %v416
      %449 = vmatprep.subr.mxu0 0.0
      %450 = vmatpush1.msra.mxu0 %v417
      %451 = vmatprep.subr.mxu0 0.0
      %452 = vmatpush1.msra.mxu0 %v418
      %453 = vmatprep.subr.mxu0 0.0
      %454 = vmatpush1.msra.mxu0 %v419
      %455 = vmatprep.subr.mxu0 0.0
      %456 = vmatpush1.msra.mxu0 %v420
      %457 = vmatprep.subr.mxu0 0.0
      %458 = vmatpush1.msra.mxu0 %v421
      %459 = vmatprep.subr.mxu0 0.0
      %460 = vmatpush1.msra.mxu0 %v422
      %461 = vmatprep.subr.mxu0 0.0
      %462 = vmatpush1.msra.mxu0 %v423
      %463 = vmatprep.subr.mxu0 0.0
      %464 = vmatpush1.msra.mxu0 0.0
      %465 = vmatprep.subr.mxu0 0.0
      %466 = vmatpush1.msra.mxu0 0.0
      %467 = vmatprep.subr.mxu0 0.0
      %468 = vmatpush1.msra.mxu0 0.0
      %469 = vmatprep.subr.mxu0 0.0
      %470 = vmatpush1.msra.mxu0 0.0
      %471 = vmatprep.subr.mxu0 0.0
      %472 = vmatpush1.msra.mxu0 0.0
      %473 = vmatprep.subr.mxu0 0.0
      %474 = vmatpush1.msra.mxu0 0.0
      %475 = vmatprep.subr.mxu0 0.0
      %476 = vmatpush1.msra.mxu0 0.0
      %477 = vmatprep.subr.mxu0 0.0
      %478 = vmatpush1.msra.mxu0 0.0
      %479 = vmatprep.subr.mxu0 0.0
      %480 = vmatpush1.msra.mxu0 0.0
      %481 = vmatprep.subr.mxu0 0.0
      %482 = vmatpush1.msra.mxu0 0.0
      %483 = vmatprep.subr.mxu0 0.0
      %484 = vmatpush1.msra.mxu0 0.0
      %485 = vmatprep.subr.mxu0 0.0
      %486 = vmatpush1.msra.mxu0 0.0
      %487 = vmatprep.subr.mxu0 0.0
      %488 = vmatpush1.msra.mxu0 0.0
      %489 = vmatprep.subr.mxu0 0.0
      %490 = vmatpush1.msra.mxu0 0.0
      %491 = vmatprep.subr.mxu0 0.0
      %492 = vmatpush1.msra.mxu0 0.0
      %493 = vmatprep.subr.mxu0 0.0
      %494 = vmatpush1.msra.mxu0 0.0
      %495 = vmatprep.mubr.f32.mxu0 0.0
      %496 = vmatmul.mubr.f32.gmra.mrb[0].mxu0 %v400
      %v497 = vpop.f32.mrb[0].mxu0
      %v498 = vadd.f32 %v429, %v497
      %v499 = vpop.f32.mrb[0].mxu0
      %500 = vmatprep.mubr.f32.mxu0 0.0
      %501 = vmatmul.mubr.f32.gmra.mrb[0].mxu0 %v401
      %v502 = vpop.f32.mrb[0].mxu0
      %v503 = vadd.f32 %v429, %v502
      %v504 = vpop.f32.mrb[0].mxu0
      %505 = vmatprep.mubr.f32.mxu0 0.0
      %506 = vmatmul.mubr.f32.gmra.mrb[0].mxu0 %v402
      %v507 = vpop.f32.mrb[0].mxu0
      %v508 = vadd.f32 %v429, %v507
      %v509 = vpop.f32.mrb[0].mxu0
      %510 = vmatprep.mubr.f32.mxu0 0.0
      %511 = vmatmul.mubr.f32.gmra.mrb[0].mxu0 %v403
      %v512 = vpop.f32.mrb[0].mxu0
      %v513 = vadd.f32 %v429, %v512
      %v514 = vpop.f32.mrb[0].mxu0
      %515 = vmatprep.mubr.f32.mxu0 0.0
      %516 = vmatmul.mubr.f32.gmra.mrb[0].mxu0 %v404
      %v517 = vpop.f32.mrb[0].mxu0
      %v518 = vadd.f32 %v429, %v517
      %v519 = vpop.f32.mrb[0].mxu0
      %520 = vmatprep.mubr.f32.mxu0 0.0
      %521 = vmatmul.mubr.f32.gmra.mrb[0].mxu0 %v405
      %v522 = vpop.f32.mrb[0].mxu0
      %v523 = vadd.f32 %v429, %v522
      %v524 = vpop.f32.mrb[0].mxu0
      %525 = vmatprep.mubr.f32.mxu0 0.0
      %526 = vmatmul.mubr.f32.gmra.mrb[0].mxu0 %v406
      %v527 = vpop.f32.mrb[0].mxu0
      %v528 = vadd.f32 %v429, %v527
      %v529 = vpop.f32.mrb[0].mxu0
      %530 = vmatprep.mubr.f32.mxu0 0.0
      %531 = vmatmul.mubr.f32.gmra.mrb[0].mxu0 %v407
      %v532 = vpop.f32.mrb[0].mxu0
      %v533 = vadd.f32 %v429, %v532
      %v534 = vpop.f32.mrb[0].mxu0
      %535 = vdwg.mxu0
      %vm536 = vcmp.gt.f32.partialorder %v498, 0.0
      %vm537 = vcmp.gt.f32.partialorder %v503, 0.0
      %vm538 = vcmp.gt.f32.partialorder %v508, 0.0
      %vm539 = vcmp.gt.f32.partialorder %v513, 0.0
      %vm540 = vcmp.gt.f32.partialorder %v518, 0.0
      %vm541 = vcmp.gt.f32.partialorder %v523, 0.0
      %vm542 = vcmp.gt.f32.partialorder %v528, 0.0
      %vm543 = vcmp.gt.f32.partialorder %v533, 0.0
      %v544 = vmul.f32 %v498, 0.01
      %v545 = vmul.f32 %v503, 0.01
      %v546 = vmul.f32 %v508, 0.01
      %v547 = vmul.f32 %v513, 0.01
      %v548 = vmul.f32 %v518, 0.01
      %v549 = vmul.f32 %v523, 0.01
      %v550 = vmul.f32 %v528, 0.01
      %v551 = vmul.f32 %v533, 0.01
      %v552 = vsel %vm536, %v498, %v544
      %v553 = vsel %vm537, %v503, %v545
      %v554 = vsel %vm538, %v508, %v546
      %v555 = vsel %vm539, %v513, %v547
      %v556 = vsel %vm540, %v518, %v548
      %v557 = vsel %vm541, %v523, %v549
      %v558 = vsel %vm542, %v528, %v550
      %v559 = vsel %vm543, %v533, %v551
      %560 = vst [vmem:[%s221] sm:$0xff] %v552
      %561 = vst [vmem:[%s221 + $0x8] sm:$0xff] %v553
      %562 = vst [vmem:[%s221 + $0x10] sm:$0xff] %v554
      %563 = vst [vmem:[%s221 + $0x18] sm:$0xff] %v555
      %564 = vst [vmem:[%s221 + $0x20] sm:$0xff] %v556
      %565 = vst [vmem:[%s221 + $0x28] sm:$0xff] %v557
      %566 = vst [vmem:[%s221 + $0x30] sm:$0xff] %v558
      %567 = vst [vmem:[%s221 + $0x38] sm:$0xff] %v559
      %p568 = scmp.lt.s32.totalorder %s18, 1
      %s569 = scalar_select %p568, %s18, 1
      %p570 = scmp.lt.s32.totalorder %s19, 0
      %s571 = scalar_select %p570, %s19, 0
      %s572 = smul.addr %s569, 8
      %s573 = sadd.s32 %s571, %s572
      %s574 = smul.addr %s573, 8
      %s575 = scalar_lea.vmem %s3, %s574
      // Predicated region
      $region37: #{down_forward.1} parent=31 // pred_check
        %p576 = pneg %p124
      $region38: #{down_forward.1} parent=31 // pred_check_branch
        %578 = sbr.rel (%p576) target = $region40
      $region39: #{down_forward.1} parent=31 // pred_region
        _
      $region40: #{down_forward.1} parent=31 // pred_fallthru
        _
    $region32: #{down_forward.1} parent=5 // pred_fallthru
      _
    %p579 = scmp.le.s32.totalorder 2, %s9
    // Predicated region
    $region41: #{down_forward.1} parent=5 // pred_check
      %p580 = pneg %p579
    $region42: #{down_forward.1} parent=5 // pred_check_branch
      %582 = sbr.rel (%p580) target = $region44
    $region43: #{down_forward.1} parent=5 // pred_region
      %s583 = ssub.s32 %s9, 2
      // Predicated region
      $region45: #{down_forward.1} parent=43 // pred_check
        %p584 = pneg %p130
      $region46: #{down_forward.1} parent=43 // pred_check_branch
        %586 = sbr.rel (%p584) target = $region48
      $region47: #{down_forward.1} parent=43 // pred_region
        %p587 = scmp.lt.s32.totalorder %s20, 1
        %s588 = scalar_select %p587, %s20, 1
        %p589 = scmp.lt.s32.totalorder %s21, 0
        %s590 = scalar_select %p589, %s21, 0
        %s591 = smul.addr %s588, 8
        %s592 = sadd.s32 %s590, %s591
        %s593 = smul.addr %s592, 8
        %s594 = scalar_lea.vmem %s3, %s593
      $region48: #{down_forward.1} parent=43 // pred_fallthru
        _
    $region44: #{down_forward.1} parent=5 // pred_fallthru
      _
  $region6: #{down_forward.1} parent=0 // loop_footer
    %s13 = sadd.s32 1, %s9
  $region7: #{down_forward.1} parent=0 // loop_footer_branch
    %8 = sbr.rel target = $region3
  $region8: #{down_forward.1} parent=0 // loop_exit
    _

</llo_original>
